<compile_context>
chip_gen: v7x
topology: tpu7x:2x2x1
jax: 0.10.0
libtpu: 0.0.40
codegen_flags: <defaults>
</compile_context>

<pallas_src>
import jax
import jax.numpy as jnp
from jax.experimental import pallas as pl
from jax.experimental.pallas import tpu as pltpu


_INV_SQRT2 = 0.7071067811865476


def _erf_approx(z):
    # Abramowitz & Stegun 7.1.26 rational approximation, |error| <= 1.5e-7.
    p = 0.3275911
    a1, a2, a3, a4, a5 = (0.254829592, -0.284496736, 1.421413741,
                          -1.453152027, 1.061405429)
    za = jnp.abs(z)
    t = 1.0 / (1.0 + p * za)
    poly = t * (a1 + t * (a2 + t * (a3 + t * (a4 + t * a5))))
    e = 1.0 - poly * jnp.exp(-za * za)
    return jnp.where(z < 0, -e, e)


def _gelu_exact(x):
    # Matches torch.nn.GELU() (approximate='none') to ~1e-7.
    return 0.5 * x * (1.0 + _erf_approx(x * _INV_SQRT2))


def _mlp_kernel(x_ref, w1_ref, b1_ref, w2_ref, b2_ref, o_ref):
    # x : (TM, Dp) bf16   w1: (Dp, Hp) bf16   b1: (1, Hp) f32
    # w2: (Hp, Dp) bf16   b2: (1, Dp) f32     o : (TM, Dp) f32
    h = jnp.dot(x_ref[...], w1_ref[...], preferred_element_type=jnp.float32)
    h = _gelu_exact(h + b1_ref[...])                       # f32 bias + GELU (VPU/EUP)
    y = jnp.dot(h.astype(jnp.bfloat16), w2_ref[...],       # bf16 MXU, f32 accumulate
                preferred_element_type=jnp.float32)
    o_ref[...] = (y + b2_ref[...]).astype(o_ref.dtype)


def _round_up(v, m):
    return (v + m - 1) // m * m


def _pad2(a, rows, cols):
    r, c = a.shape
    if (r, c) == (rows, cols):
        return a
    return jnp.zeros((rows, cols), a.dtype).at[:r, :c].set(a)


def mlp_forward(x, params, tm=512):
    """x: (..., dim) float32. params use PyTorch nn.Linear layout:
       fc1_w (4*dim, dim), fc1_b (4*dim,), fc2_w (dim, 4*dim), fc2_b (dim,)."""
    orig_shape = x.shape
    D = orig_shape[-1]
    Hd = params["fc1_w"].shape[0]
    M = int(x.size // D)

    Dp = _round_up(D, 128)            # lane-dense input/output channels
    Hp = _round_up(Hd, 128)           # lane-dense hidden channels
    TM = min(tm, _round_up(M, 16))    # row tile (multiple of bf16 sublane pack)
    Mp = _round_up(M, TM)

    # bf16 MXU inputs, zero-padded to (8,128)-friendly shapes (zeros are inert:
    # padded K columns contribute 0, padded output columns are sliced off).
    x_p = _pad2(x.reshape(M, D).astype(jnp.bfloat16), Mp, Dp)
    w1_p = _pad2(params["fc1_w"].T.astype(jnp.bfloat16), Dp, Hp)
    w2_p = _pad2(params["fc2_w"].T.astype(jnp.bfloat16), Hp, Dp)
    b1_p = _pad2(params["fc1_b"].reshape(1, Hd).astype(jnp.float32), 1, Hp)
    b2_p = _pad2(params["fc2_b"].reshape(1, D).astype(jnp.float32), 1, Dp)

    out = pl.pallas_call(
        _mlp_kernel,
        out_shape=jax.ShapeDtypeStruct((Mp, Dp), jnp.float32),
        grid=(pl.cdiv(Mp, TM),),
        in_specs=[
            pl.BlockSpec((TM, Dp), lambda i: (i, 0)),   # x row tile (pipelined)
            pl.BlockSpec((Dp, Hp), lambda i: (0, 0)),   # W1: VMEM-resident
            pl.BlockSpec((1, Hp), lambda i: (0, 0)),    # b1: VMEM-resident
            pl.BlockSpec((Hp, Dp), lambda i: (0, 0)),   # W2: VMEM-resident
            pl.BlockSpec((1, Dp), lambda i: (0, 0)),    # b2: VMEM-resident
        ],
        out_specs=pl.BlockSpec((TM, Dp), lambda i: (i, 0)),
        compiler_params=pltpu.CompilerParams(
            dimension_semantics=("parallel",)),         # megacore on v7x
    )(x_p, w1_p, b1_p, w2_p, b2_p)

    return out[:M, :D].reshape(orig_shape)


# ---------------- references (plain JAX) ----------------

def mlp_reference(x, params):
    """Exact f32 reference matching the PyTorch module."""
    h = x @ params["fc1_w"].T + params["fc1_b"]
    h = jax.nn.gelu(h, approximate=False)
    return h @ params["fc2_w"].T + params["fc2_b"]


def mlp_reference_bf16(x, params):
    """Reference that emulates the kernel's numerics (bf16 MXU inputs, f32 accum)."""
    xb = x.astype(jnp.bfloat16)
    w1 = params["fc1_w"].T.astype(jnp.bfloat16)
    w2 = params["fc2_w"].T.astype(jnp.bfloat16)
    h = jnp.dot(xb, w1, preferred_element_type=jnp.float32) + params["fc1_b"]
    h = jax.nn.gelu(h, approximate=False)
    return (jnp.dot(h.astype(jnp.bfloat16), w2,
                    preferred_element_type=jnp.float32) + params["fc2_b"])


if __name__ == "__main__":
    key = jax.random.PRNGKey(0)
    # (B, N, dim): small canonical case + a bigger one exercising multi-tile grid
    # (M=1024 -> two 512-row tiles) and non-multiple-of-128 channel padding.
    cases = [(2, 8, 32), (2, 512, 96)]

    for (B, N, D) in cases:
        Hd = 4 * D
        ks = jax.random.split(jax.random.fold_in(key, 1000 * D + N), 5)
        params = {
            "fc1_w": (D ** -0.5) * jax.random.normal(ks[0], (Hd, D), jnp.float32),
            "fc1_b": 0.1 * jax.random.normal(ks[1], (Hd,), jnp.float32),
            "fc2_w": (Hd ** -0.5) * jax.random.normal(ks[2], (D, Hd), jnp.float32),
            "fc2_b": 0.1 * jax.random.normal(ks[3], (D,), jnp.float32),
        }
        x = jax.random.normal(ks[4], (B, N, D), jnp.float32)

        out = jax.block_until_ready(mlp_forward(x, params))
        assert out.shape == (B, N, D)

        # Gate 1: match the kernel's own precision model tightly.
        ref_b = mlp_reference_bf16(x, params)
        err_b = float(jnp.max(jnp.abs(out - ref_b)))
        assert jnp.allclose(out, ref_b, atol=5e-3, rtol=5e-3), err_b

        # Gate 2: match the exact f32 PyTorch semantics within bf16-input tolerance.
        ref_f = mlp_reference(x, params)
        err_f = float(jnp.max(jnp.abs(out - ref_f)))
        assert jnp.allclose(out, ref_f, atol=2e-2, rtol=2e-2), err_f

    print("KERNEL_OK")
</pallas_src>

<mosaic_0001>
module attributes {stable_mosaic.version = 11 : i64} {
  func.func @_mlp_kernel(%arg0: i32, %arg1: memref<16x128xbf16, #tpu.memory_space<vmem>>, %arg2: memref<128x128xbf16, #tpu.memory_space<vmem>>, %arg3: memref<1x128xf32, #tpu.memory_space<vmem>>, %arg4: memref<128x128xbf16, #tpu.memory_space<vmem>>, %arg5: memref<1x128xf32, #tpu.memory_space<vmem>>, %arg6: memref<16x128xf32, #tpu.memory_space<vmem>>) attributes {dimension_semantics = [#tpu.dimension_semantics<parallel>], iteration_bounds = array<i64: 1>, scalar_prefetch = 0 : i64, scratch_operands = 0 : i64, tpu.core_type = #tpu.core_type<tc>, window_params = [{transform_indices = @transform_0, window_bounds = array<i64: 16, 128>}, {pipeline_mode = #tpu.pipeline_mode<synchronous>, transform_indices = @transform_1, window_bounds = array<i64: 128, 128>}, {pipeline_mode = #tpu.pipeline_mode<synchronous>, transform_indices = @transform_2, window_bounds = array<i64: 1, 128>}, {pipeline_mode = #tpu.pipeline_mode<synchronous>, transform_indices = @transform_3, window_bounds = array<i64: 128, 128>}, {pipeline_mode = #tpu.pipeline_mode<synchronous>, transform_indices = @transform_4, window_bounds = array<i64: 1, 128>}, {transform_indices = @transform_5, window_bounds = array<i64: 16, 128>}]} {
    %c0 = arith.constant 0 : index
    %c0_0 = arith.constant 0 : index
    %0 = vector.load %arg1[%c0, %c0_0] : memref<16x128xbf16, #tpu.memory_space<vmem>>, vector<16x128xbf16>
    %c0_1 = arith.constant 0 : index
    %c0_2 = arith.constant 0 : index
    %1 = vector.load %arg2[%c0_1, %c0_2] : memref<128x128xbf16, #tpu.memory_space<vmem>>, vector<128x128xbf16>
    %cst = arith.constant dense<0.000000e+00> : vector<16x128xf32>
    %2 = tpu.matmul %0, %1, %cst {dimension_numbers = #tpu.dot_dimension_numbers<[1], [0], [0], [1], [0, 0, 1, 1], [], []>} : vector<16x128xbf16>, vector<128x128xbf16>, vector<16x128xf32> -> vector<16x128xf32>
    %c0_3 = arith.constant 0 : index
    %c0_4 = arith.constant 0 : index
    %3 = vector.load %arg3[%c0_3, %c0_4] : memref<1x128xf32, #tpu.memory_space<vmem>>, vector<1x128xf32>
    %4 = vector.broadcast %3 : vector<1x128xf32> to vector<16x128xf32>
    %5 = arith.addf %2, %4 : vector<16x128xf32>
    %cst_5 = arith.constant 5.000000e-01 : f32
    %6 = vector.broadcast %cst_5 : f32 to vector<16x128xf32>
    %7 = arith.mulf %6, %5 : vector<16x128xf32>
    %cst_6 = arith.constant 0.707106769 : f32
    %8 = vector.broadcast %cst_6 : f32 to vector<16x128xf32>
    %9 = arith.mulf %5, %8 : vector<16x128xf32>
    %10 = math.absf %9 : vector<16x128xf32>
    %cst_7 = arith.constant 0.327591091 : f32
    %11 = vector.broadcast %cst_7 : f32 to vector<16x128xf32>
    %12 = arith.mulf %11, %10 : vector<16x128xf32>
    %cst_8 = arith.constant 1.000000e+00 : f32
    %13 = vector.broadcast %cst_8 : f32 to vector<16x128xf32>
    %14 = arith.addf %13, %12 : vector<16x128xf32>
    %cst_9 = arith.constant 1.000000e+00 : f32
    %15 = vector.broadcast %cst_9 : f32 to vector<16x128xf32>
    %16 = arith.divf %15, %14 : vector<16x128xf32>
    %cst_10 = arith.constant 1.06140542 : f32
    %17 = vector.broadcast %cst_10 : f32 to vector<16x128xf32>
    %18 = arith.mulf %16, %17 : vector<16x128xf32>
    %cst_11 = arith.constant -1.45315206 : f32
    %19 = vector.broadcast %cst_11 : f32 to vector<16x128xf32>
    %20 = arith.addf %19, %18 : vector<16x128xf32>
    %21 = arith.mulf %16, %20 : vector<16x128xf32>
    %cst_12 = arith.constant 1.42141378 : f32
    %22 = vector.broadcast %cst_12 : f32 to vector<16x128xf32>
    %23 = arith.addf %22, %21 : vector<16x128xf32>
    %24 = arith.mulf %16, %23 : vector<16x128xf32>
    %cst_13 = arith.constant -0.284496725 : f32
    %25 = vector.broadcast %cst_13 : f32 to vector<16x128xf32>
    %26 = arith.addf %25, %24 : vector<16x128xf32>
    %27 = arith.mulf %16, %26 : vector<16x128xf32>
    %cst_14 = arith.constant 0.254829586 : f32
    %28 = vector.broadcast %cst_14 : f32 to vector<16x128xf32>
    %29 = arith.addf %28, %27 : vector<16x128xf32>
    %30 = arith.mulf %16, %29 : vector<16x128xf32>
    %cst_15 = arith.constant 0.000000e+00 : f32
    %31 = vector.broadcast %cst_15 : f32 to vector<16x128xf32>
    %32 = arith.subf %31, %10 : vector<16x128xf32>
    %33 = arith.mulf %32, %10 : vector<16x128xf32>
    %34 = math.exp %33 : vector<16x128xf32>
    %35 = arith.mulf %30, %34 : vector<16x128xf32>
    %cst_16 = arith.constant 1.000000e+00 : f32
    %36 = vector.broadcast %cst_16 : f32 to vector<16x128xf32>
    %37 = arith.subf %36, %35 : vector<16x128xf32>
    %cst_17 = arith.constant 0.000000e+00 : f32
    %38 = vector.broadcast %cst_17 : f32 to vector<16x128xf32>
    %39 = arith.cmpf olt, %9, %38 : vector<16x128xf32>
    %cst_18 = arith.constant 0.000000e+00 : f32
    %40 = vector.broadcast %cst_18 : f32 to vector<16x128xf32>
    %41 = arith.subf %40, %37 : vector<16x128xf32>
    %42 = arith.select %39, %41, %37 : vector<16x128xi1>, vector<16x128xf32>
    %cst_19 = arith.constant 1.000000e+00 : f32
    %43 = vector.broadcast %cst_19 : f32 to vector<16x128xf32>
    %44 = arith.addf %43, %42 : vector<16x128xf32>
    %45 = arith.mulf %7, %44 : vector<16x128xf32>
    %46 = arith.truncf %45 : vector<16x128xf32> to vector<16x128xbf16>
    %c0_20 = arith.constant 0 : index
    %c0_21 = arith.constant 0 : index
    %47 = vector.load %arg4[%c0_20, %c0_21] : memref<128x128xbf16, #tpu.memory_space<vmem>>, vector<128x128xbf16>
    %cst_22 = arith.constant dense<0.000000e+00> : vector<16x128xf32>
    %48 = tpu.matmul %46, %47, %cst_22 {dimension_numbers = #tpu.dot_dimension_numbers<[1], [0], [0], [1], [0, 0, 1, 1], [], []>} : vector<16x128xbf16>, vector<128x128xbf16>, vector<16x128xf32> -> vector<16x128xf32>
    %c0_23 = arith.constant 0 : index
    %c0_24 = arith.constant 0 : index
    %49 = vector.load %arg5[%c0_23, %c0_24] : memref<1x128xf32, #tpu.memory_space<vmem>>, vector<1x128xf32>
    %50 = vector.broadcast %49 : vector<1x128xf32> to vector<16x128xf32>
    %51 = arith.addf %48, %50 : vector<16x128xf32>
    %c0_25 = arith.constant 0 : index
    %c0_26 = arith.constant 0 : index
    %52 = vector.load %arg6[%c0_25, %c0_26] : memref<16x128xf32, #tpu.memory_space<vmem>>, vector<16x128xf32>
    tpu.vector_store %arg6[%c0_25, %c0_26], %51 {strides = array<i32>} : memref<16x128xf32, #tpu.memory_space<vmem>>, vector<16x128xf32>,
    return
  }
  func.func @transform_0(%arg0: i32) -> (i32, i32) {
    %c0_i32 = arith.constant 0 : i32
    %c0_i32_0 = arith.constant 0 : i32
    return %arg0, %c0_i32 : i32, i32
  }
  func.func @transform_1(%arg0: i32) -> (i32, i32) {
    %c0_i32 = arith.constant 0 : i32
    %c0_i32_0 = arith.constant 0 : i32
    %c0_i32_1 = arith.constant 0 : i32
    return %c0_i32, %c0_i32_0 : i32, i32
  }
  func.func @transform_2(%arg0: i32) -> (i32, i32) {
    %c0_i32 = arith.constant 0 : i32
    %c0_i32_0 = arith.constant 0 : i32
    %c0_i32_1 = arith.constant 0 : i32
    return %c0_i32, %c0_i32_0 : i32, i32
  }
  func.func @transform_3(%arg0: i32) -> (i32, i32) {
    %c0_i32 = arith.constant 0 : i32
    %c0_i32_0 = arith.constant 0 : i32
    %c0_i32_1 = arith.constant 0 : i32
    return %c0_i32, %c0_i32_0 : i32, i32
  }
  func.func @transform_4(%arg0: i32) -> (i32, i32) {
    %c0_i32 = arith.constant 0 : i32
    %c0_i32_0 = arith.constant 0 : i32
    %c0_i32_1 = arith.constant 0 : i32
    return %c0_i32, %c0_i32_0 : i32, i32
  }
  func.func @transform_5(%arg0: i32) -> (i32, i32) {
    %c0_i32 = arith.constant 0 : i32
    %c0_i32_0 = arith.constant 0 : i32
    return %arg0, %c0_i32 : i32, i32
  }
}

</mosaic_0001>

<llo_original>
// kernel: tpu_custom_call.1
$region0: #{tpu_custom_call.1}
  #allocation0 [shape = 'u32[]', space=smem, size = 0x4, offset = 0x4, fixed_abs, tag = 'smem constant byte address 0x4 - core index']
  #allocation1 [shape = 'u32[144,128]{1,0:T(1,128)}', space=vmem, size = 0x12000, scoped, tag = 'internal scratch']
  %s0 = inlined_call_operand.hbm [shape: bf16[16,128], index: 0, kind: input, shape index: {}]
  %s1 = inlined_call_operand.hbm [shape: bf16[128,128], index: 1, kind: input, shape index: {}]
  %s2 = inlined_call_operand.vmem [shape: f32[1,128], index: 2, kind: input, shape index: {}]
  %s3 = inlined_call_operand.hbm [shape: bf16[128,128], index: 3, kind: input, shape index: {}]
  %s4 = inlined_call_operand.vmem [shape: f32[1,128], index: 4, kind: input, shape index: {}]
  %s5 = inlined_call_operand.hbm [shape: f32[16,128], index: 5, kind: output, shape index: {}]
  %s6 = sld [smem:[#allocation0]]
  $region42: #{tpu_custom_call.1} parent=0
    _
  %s8 = ssub.s32 1, %s6
  %s9 = scalar_select 0, %s8, %s6
  $region1: #{tpu_custom_call.1} parent=0
    #allocation2 [shape = 'u8[4096]{0}', space=vmem, size = 0x1000, scoped, tag = 'input window, operand 0, single buffered']
    #allocation3 [shape = 's32[1]{0}', space=sflag, size = 0x4, scoped, tag = 'scoped memory for tpu_custom_call.1']
    #allocation4 [shape = 's32[1]{0}', space=sflag, size = 0x4, scoped, tag = 'scoped memory for tpu_custom_call.1']
    #allocation5 [shape = 'u8[32768]{0}', space=vmem, size = 0x8000, scoped, tag = 'input window, operand 1, single buffered']
    #allocation6 [shape = 's32[1]{0}', space=sflag, size = 0x4, scoped, tag = 'scoped memory for tpu_custom_call.1']
    #allocation7 [shape = 'u8[32768]{0}', space=vmem, size = 0x8000, scoped, tag = 'input window, operand 3, single buffered']
    #allocation8 [shape = 'u8[8192]{0}', space=vmem, size = 0x2000, scoped, tag = 'output window, operand 0, single buffered']
    %10 = vsyncpa [#allocation3], 0
    %11 = vsyncpa [#allocation6], 0
    %12 = vsyncpa [#allocation4], 0
    // Predicated region
    $region2: #{tpu_custom_call.1} parent=1 // pred_check
      _
    $region3: #{tpu_custom_call.1} parent=1 // pred_check_branch
      %14 = sbr.rel (0) target = $region5
    $region4: #{tpu_custom_call.1} parent=1 // pred_region
      %s16 = ssub.s32 128, 128
      %17 = vsyncadd [#allocation3], %s16
      %s18 = sshll.u32 [#allocation2], 4
      %s19 = int_to_ptr.vmem [resolvable:$true] %s18
      %24 = dma.hbm_to_vmem [thread:$0]  %s0, 128, %s19, [#allocation3], 64, 64, 4
    $region5: #{tpu_custom_call.1} parent=1 // pred_fallthru
      _
    // Predicated region
    $region6: #{tpu_custom_call.1} parent=1 // pred_check
      _
    $region7: #{tpu_custom_call.1} parent=1 // pred_check_branch
      %26 = sbr.rel (0) target = $region9
    $region8: #{tpu_custom_call.1} parent=1 // pred_region
      %s28 = ssub.s32 1024, 1024
      %29 = vsyncadd [#allocation6], %s28
      %s30 = sshll.u32 [#allocation5], 4
      %s31 = int_to_ptr.vmem [resolvable:$true] %s30
      %36 = dma.hbm_to_vmem [thread:$0]  %s1, 1024, %s31, [#allocation6], 64, 64, 4
    $region9: #{tpu_custom_call.1} parent=1 // pred_fallthru
      _
    // Predicated region
    $region10: #{tpu_custom_call.1} parent=1 // pred_check
      _
    $region11: #{tpu_custom_call.1} parent=1 // pred_check_branch
      %38 = sbr.rel (0) target = $region13
    $region12: #{tpu_custom_call.1} parent=1 // pred_region
      _
    $region13: #{tpu_custom_call.1} parent=1 // pred_fallthru
      _
    // Predicated region
    $region14: #{tpu_custom_call.1} parent=1 // pred_check
      _
    $region15: #{tpu_custom_call.1} parent=1 // pred_check_branch
      %40 = sbr.rel (0) target = $region17
    $region16: #{tpu_custom_call.1} parent=1 // pred_region
      %s42 = ssub.s32 1024, 1024
      %43 = vsyncadd [#allocation6], %s42
      %s44 = sshll.u32 [#allocation7], 4
      %s45 = int_to_ptr.vmem [resolvable:$true] %s44
      %50 = dma.hbm_to_vmem [thread:$0]  %s3, 1024, %s45, [#allocation6], 64, 64, 4
    $region17: #{tpu_custom_call.1} parent=1 // pred_fallthru
      _
    // Predicated region
    $region18: #{tpu_custom_call.1} parent=1 // pred_check
      _
    $region19: #{tpu_custom_call.1} parent=1 // pred_check_branch
      %52 = sbr.rel (0) target = $region21
    $region20: #{tpu_custom_call.1} parent=1 // pred_region
      _
    $region21: #{tpu_custom_call.1} parent=1 // pred_fallthru
      _
    // Predicated region
    $region22: #{tpu_custom_call.1} parent=1 // pred_check
      _
    $region23: #{tpu_custom_call.1} parent=1 // pred_check_branch
      %54 = sbr.rel (0) target = $region25
    $region24: #{tpu_custom_call.1} parent=1 // pred_region
      %55 = dma.done [#allocation3], 128
    $region25: #{tpu_custom_call.1} parent=1 // pred_fallthru
      _
    // Predicated region
    $region26: #{tpu_custom_call.1} parent=1 // pred_check
      _
    $region27: #{tpu_custom_call.1} parent=1 // pred_check_branch
      %57 = sbr.rel (0) target = $region29
    $region28: #{tpu_custom_call.1} parent=1 // pred_region
      %58 = dma.done [#allocation6], 1024
    $region29: #{tpu_custom_call.1} parent=1 // pred_fallthru
      _
    // Predicated region
    $region30: #{tpu_custom_call.1} parent=1 // pred_check
      _
    $region31: #{tpu_custom_call.1} parent=1 // pred_check_branch
      %60 = sbr.rel (0) target = $region33
    $region32: #{tpu_custom_call.1} parent=1 // pred_region
      %61 = dma.done [#allocation6], 1024
    $region33: #{tpu_custom_call.1} parent=1 // pred_fallthru
      _
    %v63 = vld [vmem:[#allocation2] sm:$0xf]
    %v64 = vld [vmem:[#allocation2 + $0x4] sm:$0xf]
    %v65 = vld [vmem:[#allocation5] sm:$0xf]
    %v66 = vld [vmem:[#allocation5 + $0x4] sm:$0xf]
    %v67 = vld [vmem:[#allocation5 + $0x8] sm:$0xf]
    %v68 = vld [vmem:[#allocation5 + $0xc] sm:$0xf]
    %v69 = vld [vmem:[#allocation5 + $0x10] sm:$0xf]
    %v70 = vld [vmem:[#allocation5 + $0x14] sm:$0xf]
    %v71 = vld [vmem:[#allocation5 + $0x18] sm:$0xf]
    %v72 = vld [vmem:[#allocation5 + $0x1c] sm:$0xf]
    %v73 = vld [vmem:[#allocation5 + $0x20] sm:$0xf]
    %v74 = vld [vmem:[#allocation5 + $0x24] sm:$0xf]
    %v75 = vld [vmem:[#allocation5 + $0x28] sm:$0xf]
    %v76 = vld [vmem:[#allocation5 + $0x2c] sm:$0xf]
    %v77 = vld [vmem:[#allocation5 + $0x30] sm:$0xf]
    %v78 = vld [vmem:[#allocation5 + $0x34] sm:$0xf]
    %v79 = vld [vmem:[#allocation5 + $0x38] sm:$0xf]
    %v80 = vld [vmem:[#allocation5 + $0x3c] sm:$0xf]
    %v81 = vld [vmem:[%s2] sm:$0x1]
    %v83 = vlaneseq
    %v84 = vshrl.u32 %v83, 7
    %v85 = vsub.s32 0, %v84
    %v86 = vrot.slane %v81, %v85
    %v90 = vunpack.c.l.b16 %v63
    %v91 = vunpack.c.l.b16 %v64
    %v92 = vpack.c.b16 %v91, %v90
    %v110 = vunpack.c.l.b16 %v65
    %v111 = vunpack.c.l.b16 %v66
    %v112 = vunpack.c.l.b16 %v67
    %v113 = vunpack.c.l.b16 %v68
    %v114 = vunpack.c.l.b16 %v69
    %v115 = vunpack.c.l.b16 %v70
    %v116 = vunpack.c.l.b16 %v71
    %v117 = vunpack.c.l.b16 %v72
    %v118 = vunpack.c.l.b16 %v73
    %v119 = vunpack.c.l.b16 %v74
    %v120 = vunpack.c.l.b16 %v75
    %v121 = vunpack.c.l.b16 %v76
    %v122 = vunpack.c.l.b16 %v77
    %v123 = vunpack.c.l.b16 %v78
    %v124 = vunpack.c.l.b16 %v79
    %v125 = vunpack.c.l.b16 %v80
    %v126 = vpack.c.b16 %v111, %v110
    %v127 = vpack.c.b16 %v113, %v112
    %v128 = vpack.c.b16 %v115, %v114
    %v129 = vpack.c.b16 %v117, %v116
    %v130 = vpack.c.b16 %v119, %v118
    %v131 = vpack.c.b16 %v121, %v120
    %v132 = vpack.c.b16 %v123, %v122
    %v133 = vpack.c.b16 %v125, %v124
    %142 = vmatprep.subr.bf16.mxu0 0
    %143 = vmatpush1.bf16.msra.mxu0 %v126
    %144 = vmatprep.subr.bf16.mxu0 0
    %145 = vmatpush1.bf16.msra.mxu0 %v127
    %146 = vmatprep.subr.bf16.mxu0 0
    %147 = vmatpush1.bf16.msra.mxu0 %v128
    %148 = vmatprep.subr.bf16.mxu0 0
    %149 = vmatpush1.bf16.msra.mxu0 %v129
    %150 = vmatprep.subr.bf16.mxu0 0
    %151 = vmatpush1.bf16.msra.mxu0 %v130
    %152 = vmatprep.subr.bf16.mxu0 0
    %153 = vmatpush1.bf16.msra.mxu0 %v131
    %154 = vmatprep.subr.bf16.mxu0 0
    %155 = vmatpush1.bf16.msra.mxu0 %v132
    %156 = vmatprep.subr.bf16.mxu0 0
    %157 = vmatpush1.bf16.msra.mxu0 %v133
    %158 = vmatprep.subr.bf16.mxu0 0
    %159 = vmatpush1.bf16.msra.mxu0 0
    %160 = vmatprep.subr.bf16.mxu0 0
    %161 = vmatpush1.bf16.msra.mxu0 0
    %162 = vmatprep.subr.bf16.mxu0 0
    %163 = vmatpush1.bf16.msra.mxu0 0
    %164 = vmatprep.subr.bf16.mxu0 0
    %165 = vmatpush1.bf16.msra.mxu0 0
    %166 = vmatprep.subr.bf16.mxu0 0
    %167 = vmatpush1.bf16.msra.mxu0 0
    %168 = vmatprep.subr.bf16.mxu0 0
    %169 = vmatpush1.bf16.msra.mxu0 0
    %170 = vmatprep.subr.bf16.mxu0 0
    %171 = vmatpush1.bf16.msra.mxu0 0
    %172 = vmatprep.subr.bf16.mxu0 0
    %173 = vmatpush1.bf16.msra.mxu0 0
    %174 = vmatprep.mubr.bf16.mxu0 0
    %175 = vmatmul.mubr.bf16.gmra.mrb[0].mxu0 %v92
    %v176 = vpop.f32.mrb[0].mxu0
    %v177 = vadd.f32 %v86, %v176
    %v178 = vpop.f32.mrb[0].mxu0
    %v179 = vpop.f32.mrb[0].mxu0
    %v180 = vadd.f32 %v86, %v179
    %v181 = vpop.f32.mrb[0].mxu0
    %182 = vdwg.mxu0
    %v183 = vmul.f32 %v177, 0.5
    %v184 = vmul.f32 %v180, 0.5
    %v185 = vmul.f32 %v177, 0.70710677
    %v186 = vmul.f32 %v180, 0.70710677
    %v187 = vand.u32 2147483647, %v185
    %v188 = vand.u32 2147483647, %v186
    %v189 = vmul.f32 %v187, 0.3275911
    %v190 = vmul.f32 %v188, 0.3275911
    %v191 = vadd.f32 %v189, 1.0
    %v192 = vadd.f32 %v190, 1.0
    %v193 = vrcp.pop %v191
    %v194 = vmul.f32 1.0, %v193
    %v195 = vrcp.pop %v192
    %v196 = vmul.f32 1.0, %v195
    %v197 = vmul.f32 %v194, 1.0614054
    %v198 = vmul.f32 %v196, 1.0614054
    %v199 = vadd.f32 %v197, -1.4531521
    %v200 = vadd.f32 %v198, -1.4531521
    %v201 = vmul.f32 %v194, %v199
    %v202 = vmul.f32 %v196, %v200
    %v203 = vadd.f32 %v201, 1.4214138
    %v204 = vadd.f32 %v202, 1.4214138
    %v205 = vmul.f32 %v194, %v203
    %v206 = vmul.f32 %v196, %v204
    %v207 = vadd.f32 %v205, -0.28449672
    %v208 = vadd.f32 %v206, -0.28449672
    %v209 = vmul.f32 %v194, %v207
    %v210 = vmul.f32 %v196, %v208
    %v211 = vadd.f32 %v209, 0.2548296
    %v212 = vadd.f32 %v210, 0.2548296
    %v213 = vmul.f32 %v194, %v211
    %v214 = vmul.f32 %v196, %v212
    %v215 = vsub.f32 0.0, %v187
    %v216 = vsub.f32 0.0, %v188
    %v217 = vmul.f32 %v215, %v187
    %v218 = vmul.f32 %v216, %v188
    %v219 = vmul.f32 %v217, 1.442695
    %v220 = vpow.pop %v219
    %v221 = vmul.f32 %v218, 1.442695
    %v222 = vpow.pop %v221
    %v223 = vmul.f32 %v213, %v220
    %v224 = vmul.f32 %v214, %v222
    %v225 = vsub.f32 1.0, %v223
    %v226 = vsub.f32 1.0, %v224
    %vm227 = vcmp.lt.f32.partialorder %v185, 0.0
    %vm228 = vcmp.lt.f32.partialorder %v186, 0.0
    %v229 = vsub.f32 0.0, %v225
    %v230 = vsub.f32 0.0, %v226
    %v231 = vsel %vm227, %v229, %v225
    %v232 = vsel %vm228, %v230, %v226
    %v233 = vadd.f32 %v231, 1.0
    %v234 = vadd.f32 %v232, 1.0
    %v235 = vmul.f32 %v183, %v233
    %v236 = vmul.f32 %v184, %v234
    %v237 = vpack.c.bf16 %v236, %v235
    %v238 = vld [vmem:[#allocation7] sm:$0xf]
    %v239 = vld [vmem:[#allocation7 + $0x4] sm:$0xf]
    %v240 = vld [vmem:[#allocation7 + $0x8] sm:$0xf]
    %v241 = vld [vmem:[#allocation7 + $0xc] sm:$0xf]
    %v242 = vld [vmem:[#allocation7 + $0x10] sm:$0xf]
    %v243 = vld [vmem:[#allocation7 + $0x14] sm:$0xf]
    %v244 = vld [vmem:[#allocation7 + $0x18] sm:$0xf]
    %v245 = vld [vmem:[#allocation7 + $0x1c] sm:$0xf]
    %v246 = vld [vmem:[#allocation7 + $0x20] sm:$0xf]
    %v247 = vld [vmem:[#allocation7 + $0x24] sm:$0xf]
    %v248 = vld [vmem:[#allocation7 + $0x28] sm:$0xf]
    %v249 = vld [vmem:[#allocation7 + $0x2c] sm:$0xf]
    %v250 = vld [vmem:[#allocation7 + $0x30] sm:$0xf]
    %v251 = vld [vmem:[#allocation7 + $0x34] sm:$0xf]
    %v252 = vld [vmem:[#allocation7 + $0x38] sm:$0xf]
    %v253 = vld [vmem:[#allocation7 + $0x3c] sm:$0xf]
    %v254 = vld [vmem:[%s4] sm:$0x1]
    %v256 = vlaneseq
    %v257 = vshrl.u32 %v256, 7
    %v258 = vsub.s32 0, %v257
    %v259 = vrot.slane %v254, %v258
    %v277 = vunpack.c.l.b16 %v238
    %v278 = vunpack.c.l.b16 %v239
    %v279 = vunpack.c.l.b16 %v240
    %v280 = vunpack.c.l.b16 %v241
    %v281 = vunpack.c.l.b16 %v242
    %v282 = vunpack.c.l.b16 %v243
    %v283 = vunpack.c.l.b16 %v244
    %v284 = vunpack.c.l.b16 %v245
    %v285 = vunpack.c.l.b16 %v246
    %v286 = vunpack.c.l.b16 %v247
    %v287 = vunpack.c.l.b16 %v248
    %v288 = vunpack.c.l.b16 %v249
    %v289 = vunpack.c.l.b16 %v250
    %v290 = vunpack.c.l.b16 %v251
    %v291 = vunpack.c.l.b16 %v252
    %v292 = vunpack.c.l.b16 %v253
    %v293 = vpack.c.b16 %v278, %v277
    %v294 = vpack.c.b16 %v280, %v279
    %v295 = vpack.c.b16 %v282, %v281
    %v296 = vpack.c.b16 %v284, %v283
    %v297 = vpack.c.b16 %v286, %v285
    %v298 = vpack.c.b16 %v288, %v287
    %v299 = vpack.c.b16 %v290, %v289
    %v300 = vpack.c.b16 %v292, %v291
    %309 = vmatprep.subr.bf16.mxu0 0
    %310 = vmatpush1.bf16.msra.mxu0 %v293
    %311 = vmatprep.subr.bf16.mxu0 0
    %312 = vmatpush1.bf16.msra.mxu0 %v294
    %313 = vmatprep.subr.bf16.mxu0 0
    %314 = vmatpush1.bf16.msra.mxu0 %v295
    %315 = vmatprep.subr.bf16.mxu0 0
    %316 = vmatpush1.bf16.msra.mxu0 %v296
    %317 = vmatprep.subr.bf16.mxu0 0
    %318 = vmatpush1.bf16.msra.mxu0 %v297
    %319 = vmatprep.subr.bf16.mxu0 0
    %320 = vmatpush1.bf16.msra.mxu0 %v298
    %321 = vmatprep.subr.bf16.mxu0 0
    %322 = vmatpush1.bf16.msra.mxu0 %v299
    %323 = vmatprep.subr.bf16.mxu0 0
    %324 = vmatpush1.bf16.msra.mxu0 %v300
    %325 = vmatprep.subr.bf16.mxu0 0
    %326 = vmatpush1.bf16.msra.mxu0 0
    %327 = vmatprep.subr.bf16.mxu0 0
    %328 = vmatpush1.bf16.msra.mxu0 0
    %329 = vmatprep.subr.bf16.mxu0 0
    %330 = vmatpush1.bf16.msra.mxu0 0
    %331 = vmatprep.subr.bf16.mxu0 0
    %332 = vmatpush1.bf16.msra.mxu0 0
    %333 = vmatprep.subr.bf16.mxu0 0
    %334 = vmatpush1.bf16.msra.mxu0 0
    %335 = vmatprep.subr.bf16.mxu0 0
    %336 = vmatpush1.bf16.msra.mxu0 0
    %337 = vmatprep.subr.bf16.mxu0 0
    %338 = vmatpush1.bf16.msra.mxu0 0
    %339 = vmatprep.subr.bf16.mxu0 0
    %340 = vmatpush1.bf16.msra.mxu0 0
    %341 = vmatprep.mubr.bf16.mxu0 0
    %342 = vmatmul.mubr.bf16.gmra.mrb[0].mxu0 %v237
    %v343 = vpop.f32.mrb[0].mxu0
    %v344 = vadd.f32 %v259, %v343
    %v345 = vpop.f32.mrb[0].mxu0
    %v346 = vpop.f32.mrb[0].mxu0
    %v347 = vadd.f32 %v259, %v346
    %v348 = vpop.f32.mrb[0].mxu0
    %349 = vdwg.mxu0
    %350 = vst [vmem:[#allocation8] sm:$0xff] %v344
    %351 = vst [vmem:[#allocation8 + $0x8] sm:$0xff] %v347
    // Predicated region
    $region34: #{tpu_custom_call.1} parent=1 // pred_check
      _
    $region35: #{tpu_custom_call.1} parent=1 // pred_check_branch
      %353 = sbr.rel (0) target = $region37
    $region36: #{tpu_custom_call.1} parent=1 // pred_region
      %s355 = ssub.s32 256, 256
      %356 = vsyncadd [#allocation4], %s355
      %s357 = sshll.u32 [#allocation8], 4
      %s358 = int_to_ptr.vmem [resolvable:$true] %s357
      %363 = dma.vmem_to_hbm [thread:$0]  %s358, 256, %s5, [#allocation4], 128, 128, 8
    $region37: #{tpu_custom_call.1} parent=1 // pred_fallthru
      _
    // Predicated region
    $region38: #{tpu_custom_call.1} parent=1 // pred_check
      _
    $region39: #{tpu_custom_call.1} parent=1 // pred_check_branch
      %365 = sbr.rel (0) target = $region41
    $region40: #{tpu_custom_call.1} parent=1 // pred_region
      %366 = dma.done [#allocation4], 256
    $region41: #{tpu_custom_call.1} parent=1 // pred_fallthru
      _
    %367 = vsyncpa [#allocation3], 1
    %368 = vsyncpa [#allocation6], 1
    %369 = vsyncpa [#allocation4], 1

</llo_original>
